<compile_context>
chip_gen: v5e
topology: v5e:2x2
jax: 0.10.0
libtpu: 0.0.40
codegen_flags: <defaults>
</compile_context>

<pallas_src>
import functools

import jax
import jax.numpy as jnp
from jax.experimental import pallas as pl
from jax.experimental.pallas import tpu as pltpu


def _round_up(x, m):
    return ((x + m - 1) // m) * m


def _cdiv(a, b):
    return -(-a // b)


def _make_kernel(num_classes, num_anchors, num_coords):
    inv_a = 1.0 / float(num_anchors)
    inv_d = 1.0 / float(num_coords)

    def kernel(cls_ref, lbl_ref, bp_ref, bl_ref, bm_ref, out_ref):
        # cls_ref: (TB, C, A)   lbl_ref: (TB, A) int32
        # bp/bl/bm: (TB, D)     out_ref: (TB, 128) f32
        labels = lbl_ref[...]

        # Running max over the tiny static class dim; every op below is a dense
        # (TB, A) vreg op with anchors on the 128-lane axis. Inputs are up-cast
        # per element *after* load so narrow dtypes stream at native width.
        m = cls_ref[:, 0, :].astype(jnp.float32)
        for c in range(1, num_classes):
            m = jnp.maximum(m, cls_ref[:, c, :].astype(jnp.float32))

        # One pass over classes: sum of exp (for LSE) + picked logit (no one-hot).
        s = jnp.zeros_like(m)
        picked = jnp.zeros_like(m)
        for c in range(num_classes):
            lc = cls_ref[:, c, :].astype(jnp.float32)
            s = s + jnp.exp(lc - m)
            picked = picked + jnp.where(labels == c, lc, 0.0)

        ce = m + jnp.log(s) - picked                               # (TB, A)
        loss_cls = jnp.sum(ce, axis=1, keepdims=True) * inv_a      # (TB, 1)

        # Exact PyTorch semantics: L1(bp*mask, bl*mask), valid for any mask value.
        mask = bm_ref[...].astype(jnp.float32)
        diff = jnp.abs(bp_ref[...].astype(jnp.float32) * mask
                       - bl_ref[...].astype(jnp.float32) * mask)   # (TB, D)
        loss_bbox = jnp.sum(diff, axis=1, keepdims=True) * inv_d   # (TB, 1)

        # Lane-dense, unmasked store: per-row loss broadcast across all 128 lanes.
        out_ref[...] = jnp.broadcast_to(loss_cls + loss_bbox, out_ref.shape)

    return kernel


@functools.partial(jax.jit, static_argnames=("tb",))
def multiloss(cls_preds, cls_labels, bbox_preds, bbox_labels, bbox_masks, *, tb=None):
    B, A, C = cls_preds.shape
    D = bbox_preds.shape[1]          # 4 * A

    # Only layout plumbing left in XLA: anchors onto the 128-lane axis.
    # TODO(synk): accept class-major (B, C, A) logits straight from the SSD conv head
    # to drop this transpose pass as well.
    cls_t = jnp.transpose(cls_preds, (0, 2, 1))                    # (B, C, A)
    lbl = cls_labels.astype(jnp.int32)                             # no-op if already i32

    def itemsize(x):
        return jnp.dtype(x.dtype).itemsize

    # Sublane granule for the narrowest streamed dtype (f32->8, bf16->16, int8->32).
    min_bytes = min(itemsize(cls_t), itemsize(bbox_preds),
                    itemsize(bbox_labels), itemsize(bbox_masks))
    sub = {1: 32, 2: 16}.get(min_bytes, 8)

    # Batch-tile selection: biggest tb whose double-buffered blocks + f32 temporaries
    # fit a conservative VMEM budget (works on v5e/v6e/v7x once the scoped limit is
    # raised below), never exceeding the batch, split once so the grid has >=2 steps
    # (megacore sharding + pipeline overlap) when the batch allows it.
    in_row = (C * A * itemsize(cls_t) + A * 4
              + D * (itemsize(bbox_preds) + itemsize(bbox_labels) + itemsize(bbox_masks)))
    tmp_row = (6 * A + 2 * D) * 4
    row_bytes = 2 * (in_row + 128 * 4) + tmp_row
    budget = 28 * 1024 * 1024
    tb_cap = max(sub, (budget // row_bytes) // sub * sub)

    if tb is None:
        if B < sub:
            tb = B                                  # single full-extent batch block
        else:
            tb = max(sub, min(tb_cap, (B // sub) * sub))
            if _cdiv(B, tb) < 2 and B >= 2 * sub:
                tb = _round_up(_cdiv(B, 2), sub)    # 2 blocks -> 2 TensorCores

    n_blocks = _cdiv(B, tb)
    kernel = _make_kernel(C, A, D)

    bytes_accessed = (cls_t.size * itemsize(cls_t) + lbl.size * 4
                      + bbox_preds.size * itemsize(bbox_preds)
                      + bbox_labels.size * itemsize(bbox_labels)
                      + bbox_masks.size * itemsize(bbox_masks)
                      + n_blocks * tb * 128 * 4)
    cost = pl.CostEstimate(
        flops=6 * B * A * C + 4 * B * A + 4 * B * D,
        transcendentals=B * A * (C + 1),
        bytes_accessed=bytes_accessed,
    )

    out = pl.pallas_call(
        kernel,
        out_shape=jax.ShapeDtypeStruct((n_blocks * tb, 128), jnp.float32),
        grid_spec=pl.GridSpec(
            grid=(n_blocks,),
            in_specs=[
                pl.BlockSpec((tb, C, A), lambda b: (b, 0, 0)),
                pl.BlockSpec((tb, A), lambda b: (b, 0)),
                pl.BlockSpec((tb, D), lambda b: (b, 0)),
                pl.BlockSpec((tb, D), lambda b: (b, 0)),
                pl.BlockSpec((tb, D), lambda b: (b, 0)),
            ],
            out_specs=pl.BlockSpec((tb, 128), lambda b: (b, 0)),
        ),
        compiler_params=pltpu.CompilerParams(
            dimension_semantics=("parallel",),       # batch blocks shard across TCs
            vmem_limit_bytes=48 * 1024 * 1024,       # > 16/32 MiB scoped defaults, < v7x 64 MiB
        ),
        cost_estimate=cost,
    )(cls_t, lbl, bbox_preds, bbox_labels, bbox_masks)

    return out[:B, 0]                                # (B,)


def _reference(cls_preds, cls_labels, bbox_preds, bbox_labels, bbox_masks):
    # pure-JAX reference of the PyTorch forward (for sanity checking)
    B, A, C = cls_preds.shape
    logits = cls_preds.reshape(-1, C)
    labels = cls_labels.reshape(-1)
    lse = jax.scipy.special.logsumexp(logits, axis=1)
    picked = jnp.take_along_axis(logits, labels[:, None], axis=1)[:, 0]
    loss_cls = (lse - picked).reshape(B, -1).mean(axis=1)
    loss_bbox = jnp.abs(bbox_preds * bbox_masks - bbox_labels * bbox_masks).mean(axis=1)
    return loss_cls + loss_bbox


if __name__ == "__main__":
    key = jax.random.PRNGKey(0)
    k1, k2, k3, k4, k5 = jax.random.split(key, 5)

    B, A, C = 2, 8, 4          # batch, num_anchors, num_classes
    D = 4 * A                  # bbox dims per batch element

    cls_preds = jax.random.normal(k1, (B, A, C), dtype=jnp.float32)
    cls_labels = jax.random.randint(k2, (B, A), 0, C, dtype=jnp.int32)
    bbox_preds = jax.random.normal(k3, (B, D), dtype=jnp.float32)
    bbox_labels = jax.random.normal(k4, (B, D), dtype=jnp.float32)
    bbox_masks = (jax.random.uniform(k5, (B, D)) > 0.3).astype(jnp.float32)

    out = multiloss(cls_preds, cls_labels, bbox_preds, bbox_labels, bbox_masks)
    out = jax.block_until_ready(out)

    ref = _reference(cls_preds, cls_labels, bbox_preds, bbox_labels, bbox_masks)
    assert out.shape == (B,)
    assert jnp.allclose(out, ref, atol=1e-5, rtol=1e-5), (out, ref)

    print("KERNEL_OK")
</pallas_src>

<mosaic_0001>
module attributes {stable_mosaic.version = 11 : i64} {
  func.func @kernel(%arg0: i32, %arg1: memref<2x4x8xf32, #tpu.memory_space<vmem>>, %arg2: memref<2x8xi32, #tpu.memory_space<vmem>>, %arg3: memref<2x32xf32, #tpu.memory_space<vmem>>, %arg4: memref<2x32xf32, #tpu.memory_space<vmem>>, %arg5: memref<2x32xf32, #tpu.memory_space<vmem>>, %arg6: memref<2x128xf32, #tpu.memory_space<vmem>>) attributes {dimension_semantics = [#tpu.dimension_semantics<parallel>], iteration_bounds = array<i64: 1>, scalar_prefetch = 0 : i64, scratch_operands = 0 : i64, tpu.core_type = #tpu.core_type<tc>, window_params = [{transform_indices = @transform_0, window_bounds = array<i64: 2, 4, 8>}, {transform_indices = @transform_1, window_bounds = array<i64: 2, 8>}, {transform_indices = @transform_2, window_bounds = array<i64: 2, 32>}, {transform_indices = @transform_3, window_bounds = array<i64: 2, 32>}, {transform_indices = @transform_4, window_bounds = array<i64: 2, 32>}, {transform_indices = @transform_5, window_bounds = array<i64: 2, 128>}]} {
    %c0 = arith.constant 0 : index
    %c0_0 = arith.constant 0 : index
    %0 = vector.load %arg2[%c0, %c0_0] : memref<2x8xi32, #tpu.memory_space<vmem>>, vector<2x8xi32>
    %c0_1 = arith.constant 0 : index
    %c0_2 = arith.constant 0 : index
    %c0_3 = arith.constant 0 : index
    %1 = vector.load %arg1[%c0_1, %c0_2, %c0_3] : memref<2x4x8xf32, #tpu.memory_space<vmem>>, vector<2x1x8xf32>
    %2 = vector.shape_cast %1 : vector<2x1x8xf32> to vector<2x8xf32>
    %c0_4 = arith.constant 0 : index
    %c1 = arith.constant 1 : index
    %c0_5 = arith.constant 0 : index
    %3 = vector.load %arg1[%c0_4, %c1, %c0_5] : memref<2x4x8xf32, #tpu.memory_space<vmem>>, vector<2x1x8xf32>
    %4 = vector.shape_cast %3 : vector<2x1x8xf32> to vector<2x8xf32>
    %5 = arith.maximumf %2, %4 : vector<2x8xf32>
    %c0_6 = arith.constant 0 : index
    %c2 = arith.constant 2 : index
    %c0_7 = arith.constant 0 : index
    %6 = vector.load %arg1[%c0_6, %c2, %c0_7] : memref<2x4x8xf32, #tpu.memory_space<vmem>>, vector<2x1x8xf32>
    %7 = vector.shape_cast %6 : vector<2x1x8xf32> to vector<2x8xf32>
    %8 = arith.maximumf %5, %7 : vector<2x8xf32>
    %c0_8 = arith.constant 0 : index
    %c3 = arith.constant 3 : index
    %c0_9 = arith.constant 0 : index
    %9 = vector.load %arg1[%c0_8, %c3, %c0_9] : memref<2x4x8xf32, #tpu.memory_space<vmem>>, vector<2x1x8xf32>
    %10 = vector.shape_cast %9 : vector<2x1x8xf32> to vector<2x8xf32>
    %11 = arith.maximumf %8, %10 : vector<2x8xf32>
    %cst = arith.constant 0.000000e+00 : f32
    %12 = vector.broadcast %cst : f32 to vector<2x8xf32>
    %cst_10 = arith.constant 0.000000e+00 : f32
    %13 = vector.broadcast %cst_10 : f32 to vector<2x8xf32>
    %c0_11 = arith.constant 0 : index
    %c0_12 = arith.constant 0 : index
    %c0_13 = arith.constant 0 : index
    %14 = vector.load %arg1[%c0_11, %c0_12, %c0_13] : memref<2x4x8xf32, #tpu.memory_space<vmem>>, vector<2x1x8xf32>
    %15 = vector.shape_cast %14 : vector<2x1x8xf32> to vector<2x8xf32>
    %16 = arith.subf %15, %11 : vector<2x8xf32>
    %17 = math.exp %16 : vector<2x8xf32>
    %18 = arith.addf %12, %17 : vector<2x8xf32>
    %c0_i32 = arith.constant 0 : i32
    %19 = vector.broadcast %c0_i32 : i32 to vector<2x8xi32>
    %20 = arith.cmpi eq, %0, %19 : vector<2x8xi32>
    %cst_14 = arith.constant 0.000000e+00 : f32
    %21 = vector.broadcast %cst_14 : f32 to vector<2x8xf32>
    %22 = arith.select %20, %15, %21 : vector<2x8xi1>, vector<2x8xf32>
    %23 = arith.addf %13, %22 : vector<2x8xf32>
    %c0_15 = arith.constant 0 : index
    %c1_16 = arith.constant 1 : index
    %c0_17 = arith.constant 0 : index
    %24 = vector.load %arg1[%c0_15, %c1_16, %c0_17] : memref<2x4x8xf32, #tpu.memory_space<vmem>>, vector<2x1x8xf32>
    %25 = vector.shape_cast %24 : vector<2x1x8xf32> to vector<2x8xf32>
    %26 = arith.subf %25, %11 : vector<2x8xf32>
    %27 = math.exp %26 : vector<2x8xf32>
    %28 = arith.addf %18, %27 : vector<2x8xf32>
    %c1_i32 = arith.constant 1 : i32
    %29 = vector.broadcast %c1_i32 : i32 to vector<2x8xi32>
    %30 = arith.cmpi eq, %0, %29 : vector<2x8xi32>
    %cst_18 = arith.constant 0.000000e+00 : f32
    %31 = vector.broadcast %cst_18 : f32 to vector<2x8xf32>
    %32 = arith.select %30, %25, %31 : vector<2x8xi1>, vector<2x8xf32>
    %33 = arith.addf %23, %32 : vector<2x8xf32>
    %c0_19 = arith.constant 0 : index
    %c2_20 = arith.constant 2 : index
    %c0_21 = arith.constant 0 : index
    %34 = vector.load %arg1[%c0_19, %c2_20, %c0_21] : memref<2x4x8xf32, #tpu.memory_space<vmem>>, vector<2x1x8xf32>
    %35 = vector.shape_cast %34 : vector<2x1x8xf32> to vector<2x8xf32>
    %36 = arith.subf %35, %11 : vector<2x8xf32>
    %37 = math.exp %36 : vector<2x8xf32>
    %38 = arith.addf %28, %37 : vector<2x8xf32>
    %c2_i32 = arith.constant 2 : i32
    %39 = vector.broadcast %c2_i32 : i32 to vector<2x8xi32>
    %40 = arith.cmpi eq, %0, %39 : vector<2x8xi32>
    %cst_22 = arith.constant 0.000000e+00 : f32
    %41 = vector.broadcast %cst_22 : f32 to vector<2x8xf32>
    %42 = arith.select %40, %35, %41 : vector<2x8xi1>, vector<2x8xf32>
    %43 = arith.addf %33, %42 : vector<2x8xf32>
    %c0_23 = arith.constant 0 : index
    %c3_24 = arith.constant 3 : index
    %c0_25 = arith.constant 0 : index
    %44 = vector.load %arg1[%c0_23, %c3_24, %c0_25] : memref<2x4x8xf32, #tpu.memory_space<vmem>>, vector<2x1x8xf32>
    %45 = vector.shape_cast %44 : vector<2x1x8xf32> to vector<2x8xf32>
    %46 = arith.subf %45, %11 : vector<2x8xf32>
    %47 = math.exp %46 : vector<2x8xf32>
    %48 = arith.addf %38, %47 : vector<2x8xf32>
    %c3_i32 = arith.constant 3 : i32
    %49 = vector.broadcast %c3_i32 : i32 to vector<2x8xi32>
    %50 = arith.cmpi eq, %0, %49 : vector<2x8xi32>
    %cst_26 = arith.constant 0.000000e+00 : f32
    %51 = vector.broadcast %cst_26 : f32 to vector<2x8xf32>
    %52 = arith.select %50, %45, %51 : vector<2x8xi1>, vector<2x8xf32>
    %53 = arith.addf %43, %52 : vector<2x8xf32>
    %54 = math.log %48 : vector<2x8xf32>
    %55 = arith.addf %11, %54 : vector<2x8xf32>
    %56 = arith.subf %55, %53 : vector<2x8xf32>
    %cst_27 = arith.constant dense<0.000000e+00> : vector<2xf32>
    %57 = vector.multi_reduction <add>, %56, %cst_27 [1] : vector<2x8xf32> to vector<2xf32>
    %58 = vector.shape_cast %57 : vector<2xf32> to vector<2x1xf32>
    %cst_28 = arith.constant 1.250000e-01 : f32
    %59 = vector.broadcast %cst_28 : f32 to vector<2x1xf32>
    %60 = arith.mulf %58, %59 : vector<2x1xf32>
    %c0_29 = arith.constant 0 : index
    %c0_30 = arith.constant 0 : index
    %61 = vector.load %arg5[%c0_29, %c0_30] : memref<2x32xf32, #tpu.memory_space<vmem>>, vector<2x32xf32>
    %c0_31 = arith.constant 0 : index
    %c0_32 = arith.constant 0 : index
    %62 = vector.load %arg3[%c0_31, %c0_32] : memref<2x32xf32, #tpu.memory_space<vmem>>, vector<2x32xf32>
    %63 = arith.mulf %62, %61 : vector<2x32xf32>
    %c0_33 = arith.constant 0 : index
    %c0_34 = arith.constant 0 : index
    %64 = vector.load %arg4[%c0_33, %c0_34] : memref<2x32xf32, #tpu.memory_space<vmem>>, vector<2x32xf32>
    %65 = arith.mulf %64, %61 : vector<2x32xf32>
    %66 = arith.subf %63, %65 : vector<2x32xf32>
    %67 = math.absf %66 : vector<2x32xf32>
    %cst_35 = arith.constant dense<0.000000e+00> : vector<2xf32>
    %68 = vector.multi_reduction <add>, %67, %cst_35 [1] : vector<2x32xf32> to vector<2xf32>
    %69 = vector.shape_cast %68 : vector<2xf32> to vector<2x1xf32>
    %cst_36 = arith.constant 3.125000e-02 : f32
    %70 = vector.broadcast %cst_36 : f32 to vector<2x1xf32>
    %71 = arith.mulf %69, %70 : vector<2x1xf32>
    %72 = arith.addf %60, %71 : vector<2x1xf32>
    %73 = vector.shape_cast %72 : vector<2x1xf32> to vector<2x1xf32>
    %74 = vector.broadcast %73 : vector<2x1xf32> to vector<2x128xf32>
    %c0_37 = arith.constant 0 : index
    %c0_38 = arith.constant 0 : index
    %75 = vector.load %arg6[%c0_37, %c0_38] : memref<2x128xf32, #tpu.memory_space<vmem>>, vector<2x128xf32>
    tpu.vector_store %arg6[%c0_37, %c0_38], %74 {strides = array<i32>} : memref<2x128xf32, #tpu.memory_space<vmem>>, vector<2x128xf32>,
    return
  }
  func.func @transform_0(%arg0: i32) -> (i32, i32, i32) {
    %c0_i32 = arith.constant 0 : i32
    %c0_i32_0 = arith.constant 0 : i32
    %c0_i32_1 = arith.constant 0 : i32
    return %arg0, %c0_i32, %c0_i32_0 : i32, i32, i32
  }
  func.func @transform_1(%arg0: i32) -> (i32, i32) {
    %c0_i32 = arith.constant 0 : i32
    %c0_i32_0 = arith.constant 0 : i32
    return %arg0, %c0_i32 : i32, i32
  }
  func.func @transform_2(%arg0: i32) -> (i32, i32) {
    %c0_i32 = arith.constant 0 : i32
    %c0_i32_0 = arith.constant 0 : i32
    return %arg0, %c0_i32 : i32, i32
  }
  func.func @transform_3(%arg0: i32) -> (i32, i32) {
    %c0_i32 = arith.constant 0 : i32
    %c0_i32_0 = arith.constant 0 : i32
    return %arg0, %c0_i32 : i32, i32
  }
  func.func @transform_4(%arg0: i32) -> (i32, i32) {
    %c0_i32 = arith.constant 0 : i32
    %c0_i32_0 = arith.constant 0 : i32
    return %arg0, %c0_i32 : i32, i32
  }
  func.func @transform_5(%arg0: i32) -> (i32, i32) {
    %c0_i32 = arith.constant 0 : i32
    %c0_i32_0 = arith.constant 0 : i32
    return %arg0, %c0_i32 : i32, i32
  }
}

</mosaic_0001>

<llo_original>
// kernel: multiloss.1
$region0: #{multiloss.1}
  #allocation0 [shape = 'u32[]', space=smem, size = 0x4, offset = 0x4, fixed_abs, tag = 'smem constant byte address 0x4 - core index']
  #allocation1 [shape = 'u32[72,128]{1,0:T(1,128)}', space=vmem, size = 0x9000, scoped, tag = 'internal scratch']
  %s0 = inlined_call_operand.hbm [shape: f32[2,4,8], index: 0, kind: input, shape index: {}]
  %s1 = inlined_call_operand.hbm [shape: s32[2,8], index: 1, kind: input, shape index: {}]
  %s2 = inlined_call_operand.vmem [shape: f32[2,32], index: 2, kind: input, shape index: {}]
  %s3 = inlined_call_operand.hbm [shape: f32[2,32], index: 3, kind: input, shape index: {}]
  %s4 = inlined_call_operand.vmem [shape: f32[2,32], index: 4, kind: input, shape index: {}]
  %s5 = inlined_call_operand.vmem [shape: f32[2,128], index: 5, kind: output, shape index: {}]
  %s6 = sld [smem:[#allocation0]]
  $region42: #{multiloss.1} parent=0
    _
  %s8 = ssub.s32 1, %s6
  %s9 = scalar_select 0, %s8, %s6
  $region1: #{multiloss.1} parent=0
    #allocation2 [shape = 'u8[4096]{0}', space=vmem, size = 0x1000, scoped, tag = 'input window, operand 0, single buffered']
    #allocation3 [shape = 's32[1]{0}', space=sflag, size = 0x4, scoped, tag = 'scoped memory for multiloss.1']
    #allocation4 [shape = 'u8[1024]{0}', space=vmem, size = 0x400, scoped, tag = 'input window, operand 1, single buffered']
    #allocation5 [shape = 's32[1]{0}', space=sflag, size = 0x4, scoped, tag = 'scoped memory for multiloss.1']
    #allocation6 [shape = 'u8[1024]{0}', space=vmem, size = 0x400, scoped, tag = 'input window, operand 3, single buffered']
    %10 = vsyncpa [#allocation3], 0
    %11 = vsyncpa [#allocation5], 0
    // Predicated region
    $region2: #{multiloss.1} parent=1 // pred_check
      _
    $region3: #{multiloss.1} parent=1 // pred_check_branch
      %13 = sbr.rel (0) target = $region5
    $region4: #{multiloss.1} parent=1 // pred_region
      %15 = vsyncadd [#allocation3], 0
      %s16 = sshll.u32 %s0, 4
      %s17 = int_to_ptr.hbm [resolvable:$true] %s16
      %s18 = sshll.u32 [#allocation2], 4
      %s19 = int_to_ptr.vmem [resolvable:$true] %s18
      %24 = dma.hbm_to_vmem [thread:$0]  %s17, 128, %s19, [#allocation3], 64, 64, 4
    $region5: #{multiloss.1} parent=1 // pred_fallthru
      _
    // Predicated region
    $region6: #{multiloss.1} parent=1 // pred_check
      _
    $region7: #{multiloss.1} parent=1 // pred_check_branch
      %26 = sbr.rel (0) target = $region9
    $region8: #{multiloss.1} parent=1 // pred_region
      %28 = vsyncadd [#allocation5], 0
      %s30 = sshll.u32 %s1, 4
      %s31 = int_to_ptr.hbm [resolvable:$true] %s30
      %s32 = sshll.u32 [#allocation4], 4
      %s33 = int_to_ptr.vmem [resolvable:$true] %s32
      %35 = dma.hbm_to_vmem [thread:$0]  %s31, 32, %s33, [#allocation5]
    $region9: #{multiloss.1} parent=1 // pred_fallthru
      _
    // Predicated region
    $region10: #{multiloss.1} parent=1 // pred_check
      _
    $region11: #{multiloss.1} parent=1 // pred_check_branch
      %37 = sbr.rel (0) target = $region13
    $region12: #{multiloss.1} parent=1 // pred_region
      _
    $region13: #{multiloss.1} parent=1 // pred_fallthru
      _
    // Predicated region
    $region14: #{multiloss.1} parent=1 // pred_check
      _
    $region15: #{multiloss.1} parent=1 // pred_check_branch
      %39 = sbr.rel (0) target = $region17
    $region16: #{multiloss.1} parent=1 // pred_region
      %41 = vsyncadd [#allocation5], 0
      %s43 = sshll.u32 %s3, 4
      %s44 = int_to_ptr.hbm [resolvable:$true] %s43
      %s45 = sshll.u32 [#allocation6], 4
      %s46 = int_to_ptr.vmem [resolvable:$true] %s45
      %48 = dma.hbm_to_vmem [thread:$0]  %s44, 32, %s46, [#allocation5]
    $region17: #{multiloss.1} parent=1 // pred_fallthru
      _
    // Predicated region
    $region18: #{multiloss.1} parent=1 // pred_check
      _
    $region19: #{multiloss.1} parent=1 // pred_check_branch
      %50 = sbr.rel (0) target = $region21
    $region20: #{multiloss.1} parent=1 // pred_region
      _
    $region21: #{multiloss.1} parent=1 // pred_fallthru
      _
    // Predicated region
    $region22: #{multiloss.1} parent=1 // pred_check
      _
    $region23: #{multiloss.1} parent=1 // pred_check_branch
      %52 = sbr.rel (0) target = $region25
    $region24: #{multiloss.1} parent=1 // pred_region
      %54 = dma.done [#allocation3], 128
    $region25: #{multiloss.1} parent=1 // pred_fallthru
      _
    // Predicated region
    $region26: #{multiloss.1} parent=1 // pred_check
      _
    $region27: #{multiloss.1} parent=1 // pred_check_branch
      %56 = sbr.rel (0) target = $region29
    $region28: #{multiloss.1} parent=1 // pred_region
      %58 = dma.done [#allocation5], 32
    $region29: #{multiloss.1} parent=1 // pred_fallthru
      _
    // Predicated region
    $region30: #{multiloss.1} parent=1 // pred_check
      _
    $region31: #{multiloss.1} parent=1 // pred_check_branch
      %60 = sbr.rel (0) target = $region33
    $region32: #{multiloss.1} parent=1 // pred_region
      %62 = dma.done [#allocation5], 32
    $region33: #{multiloss.1} parent=1 // pred_fallthru
      _
    %v63 = vld [vmem:[#allocation4] sm:$0x3]
    %v64 = vld [vmem:[#allocation2] sm:$0x1]
    %v65 = vld [vmem:[#allocation2 + $0x4] sm:$0x1]
    %v66 = vld [vmem:[#allocation2 + $0x1] sm:$0x1]
    %v67 = vld [vmem:[#allocation2 + $0x5] sm:$0x1]
    %v68 = vmax.f32 %v64, %v66
    %v69 = vmax.f32 %v65, %v67
    %v70 = vld [vmem:[#allocation2 + $0x2] sm:$0x1]
    %v71 = vld [vmem:[#allocation2 + $0x6] sm:$0x1]
    %v72 = vmax.f32 %v68, %v70
    %v73 = vmax.f32 %v69, %v71
    %v74 = vld [vmem:[#allocation2 + $0x3] sm:$0x1]
    %v75 = vld [vmem:[#allocation2 + $0x7] sm:$0x1]
    %v76 = vmax.f32 %v72, %v74
    %v77 = vmax.f32 %v73, %v75
    %v78 = vsub.f32 %v64, %v76
    %v79 = vsub.f32 %v65, %v77
    %v80 = vmul.f32 %v78, 1.442695
    %v81 = vpow.pop %v80
    %v82 = vmul.f32 %v79, 1.442695
    %v83 = vpow.pop %v82
    %v84 = vadd.f32 %v81, 0.0
    %v85 = vadd.f32 %v83, 0.0
    %vm86 = vcmp.eq.s32.totalorder %v63, 0
    %v89 = vrot.slane %v65, 7
    %vm90 = vcmask 1041409
    %v91 = vsel %vm90, %v89, %v64
    %v93 = vsel %vm86, %v91, 0.0
    %v94 = vadd.f32 %v93, 0.0
    %v95 = vsub.f32 %v66, %v76
    %v96 = vsub.f32 %v67, %v77
    %v97 = vmul.f32 %v95, 1.442695
    %v98 = vpow.pop %v97
    %v99 = vmul.f32 %v96, 1.442695
    %v100 = vpow.pop %v99
    %v101 = vadd.f32 %v84, %v98
    %v102 = vadd.f32 %v85, %v100
    %vm103 = vcmp.eq.s32.totalorder %v63, 1
    %v106 = vrot.slane %v67, 7
    %v107 = vsel %vm90, %v106, %v66
    %v109 = vsel %vm103, %v107, 0.0
    %v110 = vadd.f32 %v94, %v109
    %v111 = vsub.f32 %v70, %v76
    %v112 = vsub.f32 %v71, %v77
    %v113 = vmul.f32 %v111, 1.442695
    %v114 = vpow.pop %v113
    %v115 = vmul.f32 %v112, 1.442695
    %v116 = vpow.pop %v115
    %v117 = vadd.f32 %v101, %v114
    %v118 = vadd.f32 %v102, %v116
    %vm119 = vcmp.eq.s32.totalorder %v63, 2
    %v122 = vrot.slane %v71, 7
    %v123 = vsel %vm90, %v122, %v70
    %v125 = vsel %vm119, %v123, 0.0
    %v126 = vadd.f32 %v110, %v125
    %v127 = vsub.f32 %v74, %v76
    %v128 = vsub.f32 %v75, %v77
    %v129 = vmul.f32 %v127, 1.442695
    %v130 = vpow.pop %v129
    %v131 = vmul.f32 %v128, 1.442695
    %v132 = vpow.pop %v131
    %v133 = vadd.f32 %v117, %v130
    %v134 = vadd.f32 %v118, %v132
    %vm135 = vcmp.eq.s32.totalorder %v63, 3
    %v138 = vrot.slane %v75, 7
    %v139 = vsel %vm90, %v138, %v74
    %v141 = vsel %vm135, %v139, 0.0
    %v142 = vadd.f32 %v126, %v141
    %v143 = vlog2.pop %v133
    %v144 = vmul.f32 %v143, 0.6931472
    %v145 = vlog2.pop %v134
    %v146 = vmul.f32 %v145, 0.6931472
    %v147 = vadd.f32 %v76, %v144
    %v148 = vadd.f32 %v77, %v146
    %v150 = vrot.slane %v142, 1
    %v153 = vsub.f32 %v147, %v142
    %v154 = vsub.f32 %v148, %v150
    %v157 = vrot.slane %v154, 7
    %v158 = vsel %vm90, %v157, %v153
    %vm160 = vcmask 58368
    %v161 = vsel %vm160, %v158, 0.0
    %162 = vadd.xlane.f32.xlu0 %v161
    %v163 = vpop.xlane.xlu0 %162
    %v164 = vmul.f32 %v163, 0.125
    %v165 = vld [vmem:[%s4] sm:$0x3]
    %v166 = vld [vmem:[%s2] sm:$0x3]
    %v167 = vmul.f32 %v166, %v165
    %v168 = vld [vmem:[#allocation6] sm:$0x3]
    %v169 = vmul.f32 %v168, %v165
    %v170 = vsub.f32 %v167, %v169
    %v171 = vand.u32 2147483647, %v170
    %vm172 = vcmask 254976
    %v173 = vsel %vm172, %v171, 0.0
    %174 = vadd.xlane.f32.xlu0 %v173
    %v175 = vpop.xlane.xlu0 %174
    %v176 = vmul.f32 %v175, 0.03125
    %v177 = vadd.f32 %v164, %v176
    %178 = vst [vmem:[%s5] sm:$0x3] %v177
    // Predicated region
    $region34: #{multiloss.1} parent=1 // pred_check
      _
    $region35: #{multiloss.1} parent=1 // pred_check_branch
      %180 = sbr.rel (0) target = $region37
    $region36: #{multiloss.1} parent=1 // pred_region
      _
    $region37: #{multiloss.1} parent=1 // pred_fallthru
      _
    // Predicated region
    $region38: #{multiloss.1} parent=1 // pred_check
      _
    $region39: #{multiloss.1} parent=1 // pred_check_branch
      %182 = sbr.rel (0) target = $region41
    $region40: #{multiloss.1} parent=1 // pred_region
      _
    $region41: #{multiloss.1} parent=1 // pred_fallthru
      _
    %183 = vsyncpa [#allocation3], 1
    %184 = vsyncpa [#allocation5], 1

</llo_original>
